<compile_context>
chip_gen: v5e
topology: v5e:2x2
jax: 0.10.0
libtpu: 0.0.40
codegen_flags: <defaults>
</compile_context>

<pallas_src>
import functools
import math

import jax
import jax.numpy as jnp
from jax.experimental import pallas as pl
from jax.experimental.pallas import tpu as pltpu


D_PAD = 128  # TPU lane width: feature dim padded to this so stores are lane-dense.


def _round_up(n, m):
    return ((n + m - 1) // m) * m


# ----------------------------------------------------------------------------
# Fused EncoderLayer kernel (BN1 -> attn -> residual -> BN2 -> FFN -> residual)
# ----------------------------------------------------------------------------
def _encoder_layer_kernel(
    x_ref,                                   # (M, Dp)      M = B*S
    wqkv_ref,                                # (Dp, 3*Dp)   fused Q/K/V projection
    wo_ref,                                  # (Dp, Dp)     attention output proj
    w1_ref, b1_ref,                          # (Dp, Hp), (1, Hp)   FFN layer 1
    w2_ref, b2_ref,                          # (Hp, Dp), (1, Dp)   FFN layer 2
    g1_ref, bt1_ref, g2_ref, bt2_ref,        # (1, Dp)      BN1 / BN2 gamma & beta
    o_ref,                                   # (M, Dp)
    *, batch, seq,
):
    f32 = jnp.float32
    bf16 = jnp.bfloat16
    Dp = D_PAD

    def batchnorm(x, gamma, beta):
        # Training-mode nn.BatchNorm1d: biased batch mean/var per feature
        # channel over all (batch * seq) rows, eps = 1e-5.
        # One-pass stats (sum / sum-of-squares) in f32, affine folded into a
        # single x * scale + shift pass over the slab.
        inv_m = 1.0 / x.shape[0]
        s1 = jnp.sum(x, axis=0, keepdims=True)
        s2 = jnp.sum(x * x, axis=0, keepdims=True)
        mean = s1 * inv_m
        var = jnp.maximum(s2 * inv_m - mean * mean, 0.0)  # guard cancellation
        scale = jax.lax.rsqrt(var + 1e-5) * gamma
        shift = beta - mean * scale
        return x * scale + shift

    def mm(a_bf16, w_ref):
        # bf16 MXU operands, f32 accumulation (full-rate MXU path).
        return jnp.dot(a_bf16, w_ref[...].astype(bf16), preferred_element_type=f32)

    x = x_ref[...]

    # ---- sublayer[0]: BN -> self-attention -> residual ----------------------
    # TODO(synk): the concrete self_attn module is injected via __init__ and not
    # defined in this file; a single-head scaled-dot-product attention stands in
    # for it and ignores `pointcloud`.
    xn = batchnorm(x, g1_ref[...], bt1_ref[...])
    xn_b = xn.astype(bf16)                       # one convert, reused for Q/K/V

    qkv = mm(xn_b, wqkv_ref)                     # (M, 3*Dp), f32
    # 1/sqrt(d_model) is pre-folded into the Wq slice of wqkv on the host.
    q = qkv[:, :Dp].reshape(batch, seq, Dp)      # slices are 128-lane aligned
    k = qkv[:, Dp:2 * Dp].reshape(batch, seq, Dp)
    v = qkv[:, 2 * Dp:].reshape(batch, seq, Dp)

    s = jnp.einsum("bqd,bkd->bqk", q.astype(bf16), k.astype(bf16),
                   preferred_element_type=f32)
    s = s - jnp.max(s, axis=-1, keepdims=True)
    p = jnp.exp(s)
    p = p * pl.reciprocal(jnp.sum(p, axis=-1, keepdims=True), approx=True)
    attn = jnp.einsum("bqk,bkd->bqd", p.astype(bf16), v.astype(bf16),
                      preferred_element_type=f32)
    attn = mm(attn.reshape(batch * seq, Dp).astype(bf16), wo_ref)

    # TODO(synk): dropout is treated as identity (eval mode / p = 0).
    x = xn + attn

    # ---- sublayer[1]: BN -> feed-forward -> residual -------------------------
    # TODO(synk): the concrete feed_forward module is injected; a 2-layer ReLU
    # MLP (D -> 4D -> D) stands in for it.
    xn = batchnorm(x, g2_ref[...], bt2_ref[...])
    h = jnp.maximum(mm(xn.astype(bf16), w1_ref) + b1_ref[...], 0.0)
    ff = mm(h.astype(bf16), w2_ref) + b2_ref[...]
    o_ref[...] = xn + ff


# ----------------------------------------------------------------------------
# Wrapper: pad to lane-dense feature dim, single fused pallas_call, un-pad.
# ----------------------------------------------------------------------------
def encoder_layer_forward(x, pointcloud, params):
    """x: (B, S, D) f32; pointcloud: auxiliary input handed to self_attn."""
    del pointcloud  # stand-in attention does not consume it (see TODO in kernel)
    B, S, D = x.shape
    # S multiple of 8 keeps the in-kernel (M,128)<->(B,S,128) reshapes pure
    # layout no-ops (no VMEM copies).
    # TODO(synk): pad seq + mask BN/softmax for general S.
    assert S % 8 == 0, "seq length must be a multiple of 8 (sublane tiling)"
    M = B * S
    Dp = D_PAD
    Hp = params["w1"].shape[1]

    x_p = jnp.pad(x.reshape(M, D), ((0, 0), (0, Dp - D)))

    kernel = functools.partial(_encoder_layer_kernel, batch=B, seq=S)

    # VMEM budget from the actual footprint (single-buffered, no pipeline):
    # activation slabs + qkv + attention scores/probs + FFN hidden + weights,
    # with 2x headroom for bf16 copies / compiler temporaries.  Clamped to
    # 64 MiB so the same config is safe on v7x's smaller physical VMEM.
    est_bytes = 4 * (
        M * (8 * Dp + Hp)            # x/xn/out/attn/qkv/h slabs
        + 2 * B * S * S              # attention scores + probs
        + Dp * (4 * Dp + 2 * Hp)     # weight matrices
    )
    vmem_limit = int(min(max(2 * est_bytes, 16 * 1024 * 1024), 64 * 1024 * 1024))

    vmem_spec = pl.BlockSpec(memory_space=pltpu.MemorySpace.VMEM)

    out = pl.pallas_call(
        kernel,
        out_shape=jax.ShapeDtypeStruct((M, Dp), jnp.float32),
        in_specs=[vmem_spec] * 11,
        out_specs=vmem_spec,
        compiler_params=pltpu.CompilerParams(vmem_limit_bytes=vmem_limit),
    )(
        x_p,
        params["wqkv"], params["wo"],
        params["w1"], params["b1"], params["w2"], params["b2"],
        params["gamma1"], params["beta1"], params["gamma2"], params["beta2"],
    )
    return out[:, :D].reshape(B, S, D)


# ----------------------------------------------------------------------------
# Deterministic parameter init (zero-padded once on the host to lane width,
# QKV fused, softmax scale folded into Wq)
# ----------------------------------------------------------------------------
def init_params(key, D, H):
    Dp = D_PAD
    Hp = _round_up(H, 128)
    ks = jax.random.split(key, 8)

    def pad2(a, r, c):
        return jnp.pad(a, ((0, r - a.shape[0]), (0, c - a.shape[1])))

    wq = 0.05 * jax.random.normal(ks[0], (D, D), jnp.float32)
    wk = 0.05 * jax.random.normal(ks[1], (D, D), jnp.float32)
    wv = 0.05 * jax.random.normal(ks[2], (D, D), jnp.float32)
    wo = 0.05 * jax.random.normal(ks[3], (D, D), jnp.float32)
    w1 = 0.05 * jax.random.normal(ks[4], (D, H), jnp.float32)
    b1 = 0.01 * jax.random.normal(ks[5], (1, H), jnp.float32)
    w2 = 0.05 * jax.random.normal(ks[6], (H, D), jnp.float32)
    b2 = 0.01 * jax.random.normal(ks[7], (1, D), jnp.float32)

    # Fold the softmax scale 1/sqrt(d_model) into the Q projection (free:
    # removes an O(B*S*S) multiply from the kernel).
    wq = wq * (1.0 / math.sqrt(D))
    # Fuse Q/K/V into one (Dp, 3*Dp) weight -> a single wide MXU matmul.
    wqkv = jnp.concatenate(
        [pad2(wq, Dp, Dp), pad2(wk, Dp, Dp), pad2(wv, Dp, Dp)], axis=1)

    # nn.BatchNorm1d default init: weight (gamma) = 1, bias (beta) = 0.
    gamma = jnp.ones((1, D), jnp.float32)
    beta = jnp.zeros((1, D), jnp.float32)
    # TODO(synk): running_mean / running_var are neither used nor updated
    # (training-mode batch statistics only).

    return {
        "wqkv": wqkv, "wo": pad2(wo, Dp, Dp),
        "w1": pad2(w1, Dp, Hp), "b1": pad2(b1, 1, Hp),
        "w2": pad2(w2, Hp, Dp), "b2": pad2(b2, 1, Dp),
        "gamma1": pad2(gamma, 1, Dp), "beta1": pad2(beta, 1, Dp),
        "gamma2": pad2(gamma, 1, Dp), "beta2": pad2(beta, 1, Dp),
    }


# ----------------------------------------------------------------------------
# Demo
# ----------------------------------------------------------------------------
if __name__ == "__main__":
    B, S, D = 2, 8, 32          # batch, seq, layer.size (d_model)
    H = 4 * D                   # FFN hidden width

    key = jax.random.PRNGKey(0)
    k_x, k_pc, k_p = jax.random.split(key, 3)

    x = jax.random.normal(k_x, (B, S, D), dtype=jnp.float32)
    pointcloud = jax.random.normal(k_pc, (B, 3, S), dtype=jnp.float32)
    params = init_params(k_p, D, H)

    fwd = jax.jit(encoder_layer_forward)
    out = fwd(x, pointcloud, params)
    out = jax.block_until_ready(out)

    assert out.shape == (B, S, D)
    assert bool(jnp.all(jnp.isfinite(out)))
    print("KERNEL_OK")
</pallas_src>

<mosaic_0001>
module attributes {stable_mosaic.version = 11 : i64} {
  func.func @_encoder_layer_kernel(%arg0: memref<16x128xf32, #tpu.memory_space<vmem>>, %arg1: memref<128x384xf32, #tpu.memory_space<vmem>>, %arg2: memref<128x128xf32, #tpu.memory_space<vmem>>, %arg3: memref<128x128xf32, #tpu.memory_space<vmem>>, %arg4: memref<1x128xf32, #tpu.memory_space<vmem>>, %arg5: memref<128x128xf32, #tpu.memory_space<vmem>>, %arg6: memref<1x128xf32, #tpu.memory_space<vmem>>, %arg7: memref<1x128xf32, #tpu.memory_space<vmem>>, %arg8: memref<1x128xf32, #tpu.memory_space<vmem>>, %arg9: memref<1x128xf32, #tpu.memory_space<vmem>>, %arg10: memref<1x128xf32, #tpu.memory_space<vmem>>, %arg11: memref<16x128xf32, #tpu.memory_space<vmem>>) attributes {dimension_semantics = [], scalar_prefetch = 0 : i64, scratch_operands = 0 : i64, tpu.core_type = #tpu.core_type<tc>} {
    %c0 = arith.constant 0 : index
    %c0_0 = arith.constant 0 : index
    %0 = vector.load %arg0[%c0, %c0_0] : memref<16x128xf32, #tpu.memory_space<vmem>>, vector<16x128xf32>
    %c0_1 = arith.constant 0 : index
    %c0_2 = arith.constant 0 : index
    %1 = vector.load %arg7[%c0_1, %c0_2] : memref<1x128xf32, #tpu.memory_space<vmem>>, vector<1x128xf32>
    %c0_3 = arith.constant 0 : index
    %c0_4 = arith.constant 0 : index
    %2 = vector.load %arg8[%c0_3, %c0_4] : memref<1x128xf32, #tpu.memory_space<vmem>>, vector<1x128xf32>
    %cst = arith.constant dense<0.000000e+00> : vector<128xf32>
    %3 = vector.multi_reduction <add>, %0, %cst [0] : vector<16x128xf32> to vector<128xf32>
    %4 = vector.shape_cast %3 : vector<128xf32> to vector<1x128xf32>
    %5 = arith.mulf %0, %0 : vector<16x128xf32>
    %cst_5 = arith.constant dense<0.000000e+00> : vector<128xf32>
    %6 = vector.multi_reduction <add>, %5, %cst_5 [0] : vector<16x128xf32> to vector<128xf32>
    %7 = vector.shape_cast %6 : vector<128xf32> to vector<1x128xf32>
    %cst_6 = arith.constant 6.250000e-02 : f32
    %8 = vector.broadcast %cst_6 : f32 to vector<1x128xf32>
    %9 = arith.mulf %4, %8 : vector<1x128xf32>
    %cst_7 = arith.constant 6.250000e-02 : f32
    %10 = vector.broadcast %cst_7 : f32 to vector<1x128xf32>
    %11 = arith.mulf %7, %10 : vector<1x128xf32>
    %12 = arith.mulf %9, %9 : vector<1x128xf32>
    %13 = arith.subf %11, %12 : vector<1x128xf32>
    %cst_8 = arith.constant 0.000000e+00 : f32
    %14 = vector.broadcast %cst_8 : f32 to vector<1x128xf32>
    %15 = arith.maximumf %13, %14 : vector<1x128xf32>
    %cst_9 = arith.constant 9.99999974E-6 : f32
    %16 = vector.broadcast %cst_9 : f32 to vector<1x128xf32>
    %17 = arith.addf %15, %16 : vector<1x128xf32>
    %18 = math.rsqrt %17 : vector<1x128xf32>
    %19 = arith.mulf %18, %1 : vector<1x128xf32>
    %20 = arith.mulf %9, %19 : vector<1x128xf32>
    %21 = arith.subf %2, %20 : vector<1x128xf32>
    %22 = vector.broadcast %19 : vector<1x128xf32> to vector<16x128xf32>
    %23 = arith.mulf %0, %22 : vector<16x128xf32>
    %24 = vector.broadcast %21 : vector<1x128xf32> to vector<16x128xf32>
    %25 = arith.addf %23, %24 : vector<16x128xf32>
    %26 = arith.truncf %25 : vector<16x128xf32> to vector<16x128xbf16>
    %c0_10 = arith.constant 0 : index
    %c0_11 = arith.constant 0 : index
    %27 = vector.load %arg1[%c0_10, %c0_11] : memref<128x384xf32, #tpu.memory_space<vmem>>, vector<128x384xf32>
    %28 = arith.truncf %27 : vector<128x384xf32> to vector<128x384xbf16>
    %cst_12 = arith.constant dense<0.000000e+00> : vector<16x384xf32>
    %29 = tpu.matmul %26, %28, %cst_12 {dimension_numbers = #tpu.dot_dimension_numbers<[1], [0], [0], [1], [0, 0, 1, 1], [], []>} : vector<16x128xbf16>, vector<128x384xbf16>, vector<16x384xf32> -> vector<16x384xf32>
    %30 = vector.extract_strided_slice %29 {offsets = [0, 0], sizes = [16, 128], strides = [1, 1]} : vector<16x384xf32> to vector<16x128xf32>
    %31 = vector.shape_cast %30 : vector<16x128xf32> to vector<2x8x128xf32>
    %32 = vector.extract_strided_slice %29 {offsets = [0, 128], sizes = [16, 128], strides = [1, 1]} : vector<16x384xf32> to vector<16x128xf32>
    %33 = vector.shape_cast %32 : vector<16x128xf32> to vector<2x8x128xf32>
    %34 = vector.extract_strided_slice %29 {offsets = [0, 256], sizes = [16, 128], strides = [1, 1]} : vector<16x384xf32> to vector<16x128xf32>
    %35 = vector.shape_cast %34 : vector<16x128xf32> to vector<2x8x128xf32>
    %36 = arith.truncf %31 : vector<2x8x128xf32> to vector<2x8x128xbf16>
    %37 = arith.truncf %33 : vector<2x8x128xf32> to vector<2x8x128xbf16>
    "tpu.trace_start"() <{level = 10 : i32, message = "bqd,bkd->bqk"}> : () -> ()
    %cst_13 = arith.constant dense<0.000000e+00> : vector<2x8x8xf32>
    %38 = tpu.matmul %36, %37, %cst_13 {dimension_numbers = #tpu.dot_dimension_numbers<[2], [2], [1], [1], [0, 0, 0, 1, 1, 1], [0], [0]>} : vector<2x8x128xbf16>, vector<2x8x128xbf16>, vector<2x8x8xf32> -> vector<2x8x8xf32>
    "tpu.trace_stop"() : () -> ()
    %cst_14 = arith.constant dense<0xFF800000> : vector<2x8xf32>
    %39 = vector.multi_reduction <maximumf>, %38, %cst_14 [2] : vector<2x8x8xf32> to vector<2x8xf32>
    %40 = vector.shape_cast %39 : vector<2x8xf32> to vector<2x8x1xf32>
    %41 = vector.broadcast %40 : vector<2x8x1xf32> to vector<2x8x8xf32>
    %42 = arith.subf %38, %41 : vector<2x8x8xf32>
    %43 = math.exp %42 : vector<2x8x8xf32>
    %cst_15 = arith.constant dense<0.000000e+00> : vector<2x8xf32>
    %44 = vector.multi_reduction <add>, %43, %cst_15 [2] : vector<2x8x8xf32> to vector<2x8xf32>
    %45 = vector.shape_cast %44 : vector<2x8xf32> to vector<2x8x1xf32>
    %46 = tpu.reciprocal %45 {approx = true} : vector<2x8x1xf32> -> vector<2x8x1xf32>
    %47 = vector.broadcast %46 : vector<2x8x1xf32> to vector<2x8x8xf32>
    %48 = arith.mulf %43, %47 : vector<2x8x8xf32>
    %49 = arith.truncf %48 : vector<2x8x8xf32> to vector<2x8x8xbf16>
    %50 = arith.truncf %35 : vector<2x8x128xf32> to vector<2x8x128xbf16>
    "tpu.trace_start"() <{level = 10 : i32, message = "bqk,bkd->bqd"}> : () -> ()
    %cst_16 = arith.constant dense<0.000000e+00> : vector<2x8x128xf32>
    %51 = tpu.matmul %49, %50, %cst_16 {dimension_numbers = #tpu.dot_dimension_numbers<[2], [1], [1], [2], [0, 0, 0, 1, 1, 2], [0], [0]>} : vector<2x8x8xbf16>, vector<2x8x128xbf16>, vector<2x8x128xf32> -> vector<2x8x128xf32>
    "tpu.trace_stop"() : () -> ()
    %52 = vector.shape_cast %51 : vector<2x8x128xf32> to vector<16x128xf32>
    %53 = arith.truncf %52 : vector<16x128xf32> to vector<16x128xbf16>
    %c0_17 = arith.constant 0 : index
    %c0_18 = arith.constant 0 : index
    %54 = vector.load %arg2[%c0_17, %c0_18] : memref<128x128xf32, #tpu.memory_space<vmem>>, vector<128x128xf32>
    %55 = arith.truncf %54 : vector<128x128xf32> to vector<128x128xbf16>
    %cst_19 = arith.constant dense<0.000000e+00> : vector<16x128xf32>
    %56 = tpu.matmul %53, %55, %cst_19 {dimension_numbers = #tpu.dot_dimension_numbers<[1], [0], [0], [1], [0, 0, 1, 1], [], []>} : vector<16x128xbf16>, vector<128x128xbf16>, vector<16x128xf32> -> vector<16x128xf32>
    %57 = arith.addf %25, %56 : vector<16x128xf32>
    %c0_20 = arith.constant 0 : index
    %c0_21 = arith.constant 0 : index
    %58 = vector.load %arg9[%c0_20, %c0_21] : memref<1x128xf32, #tpu.memory_space<vmem>>, vector<1x128xf32>
    %c0_22 = arith.constant 0 : index
    %c0_23 = arith.constant 0 : index
    %59 = vector.load %arg10[%c0_22, %c0_23] : memref<1x128xf32, #tpu.memory_space<vmem>>, vector<1x128xf32>
    %cst_24 = arith.constant dense<0.000000e+00> : vector<128xf32>
    %60 = vector.multi_reduction <add>, %57, %cst_24 [0] : vector<16x128xf32> to vector<128xf32>
    %61 = vector.shape_cast %60 : vector<128xf32> to vector<1x128xf32>
    %62 = arith.mulf %57, %57 : vector<16x128xf32>
    %cst_25 = arith.constant dense<0.000000e+00> : vector<128xf32>
    %63 = vector.multi_reduction <add>, %62, %cst_25 [0] : vector<16x128xf32> to vector<128xf32>
    %64 = vector.shape_cast %63 : vector<128xf32> to vector<1x128xf32>
    %cst_26 = arith.constant 6.250000e-02 : f32
    %65 = vector.broadcast %cst_26 : f32 to vector<1x128xf32>
    %66 = arith.mulf %61, %65 : vector<1x128xf32>
    %cst_27 = arith.constant 6.250000e-02 : f32
    %67 = vector.broadcast %cst_27 : f32 to vector<1x128xf32>
    %68 = arith.mulf %64, %67 : vector<1x128xf32>
    %69 = arith.mulf %66, %66 : vector<1x128xf32>
    %70 = arith.subf %68, %69 : vector<1x128xf32>
    %cst_28 = arith.constant 0.000000e+00 : f32
    %71 = vector.broadcast %cst_28 : f32 to vector<1x128xf32>
    %72 = arith.maximumf %70, %71 : vector<1x128xf32>
    %cst_29 = arith.constant 9.99999974E-6 : f32
    %73 = vector.broadcast %cst_29 : f32 to vector<1x128xf32>
    %74 = arith.addf %72, %73 : vector<1x128xf32>
    %75 = math.rsqrt %74 : vector<1x128xf32>
    %76 = arith.mulf %75, %58 : vector<1x128xf32>
    %77 = arith.mulf %66, %76 : vector<1x128xf32>
    %78 = arith.subf %59, %77 : vector<1x128xf32>
    %79 = vector.broadcast %76 : vector<1x128xf32> to vector<16x128xf32>
    %80 = arith.mulf %57, %79 : vector<16x128xf32>
    %81 = vector.broadcast %78 : vector<1x128xf32> to vector<16x128xf32>
    %82 = arith.addf %80, %81 : vector<16x128xf32>
    %83 = arith.truncf %82 : vector<16x128xf32> to vector<16x128xbf16>
    %c0_30 = arith.constant 0 : index
    %c0_31 = arith.constant 0 : index
    %84 = vector.load %arg3[%c0_30, %c0_31] : memref<128x128xf32, #tpu.memory_space<vmem>>, vector<128x128xf32>
    %85 = arith.truncf %84 : vector<128x128xf32> to vector<128x128xbf16>
    %cst_32 = arith.constant dense<0.000000e+00> : vector<16x128xf32>
    %86 = tpu.matmul %83, %85, %cst_32 {dimension_numbers = #tpu.dot_dimension_numbers<[1], [0], [0], [1], [0, 0, 1, 1], [], []>} : vector<16x128xbf16>, vector<128x128xbf16>, vector<16x128xf32> -> vector<16x128xf32>
    %c0_33 = arith.constant 0 : index
    %c0_34 = arith.constant 0 : index
    %87 = vector.load %arg4[%c0_33, %c0_34] : memref<1x128xf32, #tpu.memory_space<vmem>>, vector<1x128xf32>
    %88 = vector.broadcast %87 : vector<1x128xf32> to vector<16x128xf32>
    %89 = arith.addf %86, %88 : vector<16x128xf32>
    %cst_35 = arith.constant 0.000000e+00 : f32
    %90 = vector.broadcast %cst_35 : f32 to vector<16x128xf32>
    %91 = arith.maximumf %89, %90 : vector<16x128xf32>
    %92 = arith.truncf %91 : vector<16x128xf32> to vector<16x128xbf16>
    %c0_36 = arith.constant 0 : index
    %c0_37 = arith.constant 0 : index
    %93 = vector.load %arg5[%c0_36, %c0_37] : memref<128x128xf32, #tpu.memory_space<vmem>>, vector<128x128xf32>
    %94 = arith.truncf %93 : vector<128x128xf32> to vector<128x128xbf16>
    %cst_38 = arith.constant dense<0.000000e+00> : vector<16x128xf32>
    %95 = tpu.matmul %92, %94, %cst_38 {dimension_numbers = #tpu.dot_dimension_numbers<[1], [0], [0], [1], [0, 0, 1, 1], [], []>} : vector<16x128xbf16>, vector<128x128xbf16>, vector<16x128xf32> -> vector<16x128xf32>
    %c0_39 = arith.constant 0 : index
    %c0_40 = arith.constant 0 : index
    %96 = vector.load %arg6[%c0_39, %c0_40] : memref<1x128xf32, #tpu.memory_space<vmem>>, vector<1x128xf32>
    %97 = vector.broadcast %96 : vector<1x128xf32> to vector<16x128xf32>
    %98 = arith.addf %95, %97 : vector<16x128xf32>
    %99 = arith.addf %82, %98 : vector<16x128xf32>
    %c0_41 = arith.constant 0 : index
    %c0_42 = arith.constant 0 : index
    %100 = vector.load %arg11[%c0_41, %c0_42] : memref<16x128xf32, #tpu.memory_space<vmem>>, vector<16x128xf32>
    tpu.vector_store %arg11[%c0_41, %c0_42], %99 {strides = array<i32>} : memref<16x128xf32, #tpu.memory_space<vmem>>, vector<16x128xf32>,
    return
  }
}

</mosaic_0001>

<llo_original>
// kernel: encoder_layer_forward.1
$region0: #{encoder_layer_forward.1}
  #allocation0 [shape = 'u32[]', space=smem, size = 0x4, offset = 0x4, fixed_abs, tag = 'smem constant byte address 0x4 - core index']
  #allocation1 [shape = 'u32[72,128]{1,0:T(1,128)}', space=vmem, size = 0x9000, scoped, tag = 'internal scratch']
  %s0 = inlined_call_operand.vmem [shape: f32[16,128], index: 0, kind: input, shape index: {}]
  %s1 = inlined_call_operand.hbm [shape: f32[128,384], index: 1, kind: input, shape index: {}]
  %s2 = inlined_call_operand.hbm [shape: f32[128,128], index: 2, kind: input, shape index: {}]
  %s3 = inlined_call_operand.hbm [shape: f32[128,128], index: 3, kind: input, shape index: {}]
  %s4 = inlined_call_operand.vmem [shape: f32[1,128], index: 4, kind: input, shape index: {}]
  %s5 = inlined_call_operand.hbm [shape: f32[128,128], index: 5, kind: input, shape index: {}]
  %s6 = inlined_call_operand.vmem [shape: f32[1,128], index: 6, kind: input, shape index: {}]
  %s7 = inlined_call_operand.vmem [shape: f32[1,128], index: 7, kind: input, shape index: {}]
  %s8 = inlined_call_operand.vmem [shape: f32[1,128], index: 8, kind: input, shape index: {}]
  %s9 = inlined_call_operand.vmem [shape: f32[1,128], index: 9, kind: input, shape index: {}]
  %s10 = inlined_call_operand.vmem [shape: f32[1,128], index: 10, kind: input, shape index: {}]
  %s11 = inlined_call_operand.vmem [shape: f32[16,128], index: 11, kind: output, shape index: {}]
  %s12 = sld [smem:[#allocation0]]
  $region70: #{encoder_layer_forward.1} parent=0
    _
  %s14 = ssub.s32 1, %s12
  %s15 = scalar_select 0, %s14, %s12
  $region1: #{encoder_layer_forward.1} parent=0
    #allocation2 [shape = 'u8[196608]{0}', space=vmem, size = 0x30000, scoped, tag = 'input window, operand 1, single buffered']
    #allocation3 [shape = 's32[1]{0}', space=sflag, size = 0x4, scoped, tag = 'scoped memory for encoder_layer_forward.1']
    #allocation4 [shape = 'u8[65536]{0}', space=vmem, size = 0x10000, scoped, tag = 'input window, operand 2, single buffered']
    #allocation5 [shape = 's32[1]{0}', space=sflag, size = 0x4, scoped, tag = 'scoped memory for encoder_layer_forward.1']
    #allocation6 [shape = 'u8[65536]{0}', space=vmem, size = 0x10000, scoped, tag = 'input window, operand 3, single buffered']
    #allocation7 [shape = 'u8[65536]{0}', space=vmem, size = 0x10000, scoped, tag = 'input window, operand 5, single buffered']
    #allocation8 [shape = 's32[1]{0}', space=sflag, size = 0x4, scoped, tag = 'scoped memory for encoder_layer_forward.1']
    %16 = vsyncpa [#allocation3], 0
    %17 = vsyncpa [#allocation5], 0
    %18 = vsyncpa [#allocation8], 0
    // Predicated region
    $region2: #{encoder_layer_forward.1} parent=1 // pred_check
      _
    $region3: #{encoder_layer_forward.1} parent=1 // pred_check_branch
      %20 = sbr.rel (0) target = $region5
    $region4: #{encoder_layer_forward.1} parent=1 // pred_region
      _
    $region5: #{encoder_layer_forward.1} parent=1 // pred_fallthru
      _
    // Predicated region
    $region6: #{encoder_layer_forward.1} parent=1 // pred_check
      _
    $region7: #{encoder_layer_forward.1} parent=1 // pred_check_branch
      %22 = sbr.rel (0) target = $region9
    $region8: #{encoder_layer_forward.1} parent=1 // pred_region
      %24 = vsyncadd [#allocation3], 0
      %s25 = sshll.u32 %s1, 4
      %s26 = int_to_ptr.hbm [resolvable:$true] %s25
      %s27 = sshll.u32 [#allocation2], 4
      %s28 = int_to_ptr.vmem [resolvable:$true] %s27
      %33 = dma.hbm_to_vmem [thread:$0]  %s26, 6144, %s28, [#allocation3], 384, 384, 24
    $region9: #{encoder_layer_forward.1} parent=1 // pred_fallthru
      _
    // Predicated region
    $region10: #{encoder_layer_forward.1} parent=1 // pred_check
      _
    $region11: #{encoder_layer_forward.1} parent=1 // pred_check_branch
      %35 = sbr.rel (0) target = $region13
    $region12: #{encoder_layer_forward.1} parent=1 // pred_region
      %37 = vsyncadd [#allocation5], 0
      %s38 = sshll.u32 %s2, 4
      %s39 = int_to_ptr.hbm [resolvable:$true] %s38
      %s40 = sshll.u32 [#allocation4], 4
      %s41 = int_to_ptr.vmem [resolvable:$true] %s40
      %46 = dma.hbm_to_vmem [thread:$0]  %s39, 2048, %s41, [#allocation5], 128, 128, 8
    $region13: #{encoder_layer_forward.1} parent=1 // pred_fallthru
      _
    // Predicated region
    $region14: #{encoder_layer_forward.1} parent=1 // pred_check
      _
    $region15: #{encoder_layer_forward.1} parent=1 // pred_check_branch
      %48 = sbr.rel (0) target = $region17
    $region16: #{encoder_layer_forward.1} parent=1 // pred_region
      %50 = vsyncadd [#allocation5], 0
      %s51 = sshll.u32 %s3, 4
      %s52 = int_to_ptr.hbm [resolvable:$true] %s51
      %s53 = sshll.u32 [#allocation6], 4
      %s54 = int_to_ptr.vmem [resolvable:$true] %s53
      %59 = dma.hbm_to_vmem [thread:$0]  %s52, 2048, %s54, [#allocation5], 128, 128, 8
    $region17: #{encoder_layer_forward.1} parent=1 // pred_fallthru
      _
    // Predicated region
    $region18: #{encoder_layer_forward.1} parent=1 // pred_check
      _
    $region19: #{encoder_layer_forward.1} parent=1 // pred_check_branch
      %61 = sbr.rel (0) target = $region21
    $region20: #{encoder_layer_forward.1} parent=1 // pred_region
      _
    $region21: #{encoder_layer_forward.1} parent=1 // pred_fallthru
      _
    // Predicated region
    $region22: #{encoder_layer_forward.1} parent=1 // pred_check
      _
    $region23: #{encoder_layer_forward.1} parent=1 // pred_check_branch
      %63 = sbr.rel (0) target = $region25
    $region24: #{encoder_layer_forward.1} parent=1 // pred_region
      %65 = vsyncadd [#allocation8], 0
      %s66 = sshll.u32 %s5, 4
      %s67 = int_to_ptr.hbm [resolvable:$true] %s66
      %s68 = sshll.u32 [#allocation7], 4
      %s69 = int_to_ptr.vmem [resolvable:$true] %s68
      %74 = dma.hbm_to_vmem [thread:$0]  %s67, 2048, %s69, [#allocation8], 128, 128, 8
    $region25: #{encoder_layer_forward.1} parent=1 // pred_fallthru
      _
    // Predicated region
    $region26: #{encoder_layer_forward.1} parent=1 // pred_check
      _
    $region27: #{encoder_layer_forward.1} parent=1 // pred_check_branch
      %76 = sbr.rel (0) target = $region29
    $region28: #{encoder_layer_forward.1} parent=1 // pred_region
      _
    $region29: #{encoder_layer_forward.1} parent=1 // pred_fallthru
      _
    // Predicated region
    $region30: #{encoder_layer_forward.1} parent=1 // pred_check
      _
    $region31: #{encoder_layer_forward.1} parent=1 // pred_check_branch
      %78 = sbr.rel (0) target = $region33
    $region32: #{encoder_layer_forward.1} parent=1 // pred_region
      _
    $region33: #{encoder_layer_forward.1} parent=1 // pred_fallthru
      _
    // Predicated region
    $region34: #{encoder_layer_forward.1} parent=1 // pred_check
      _
    $region35: #{encoder_layer_forward.1} parent=1 // pred_check_branch
      %80 = sbr.rel (0) target = $region37
    $region36: #{encoder_layer_forward.1} parent=1 // pred_region
      _
    $region37: #{encoder_layer_forward.1} parent=1 // pred_fallthru
      _
    // Predicated region
    $region38: #{encoder_layer_forward.1} parent=1 // pred_check
      _
    $region39: #{encoder_layer_forward.1} parent=1 // pred_check_branch
      %82 = sbr.rel (0) target = $region41
    $region40: #{encoder_layer_forward.1} parent=1 // pred_region
      _
    $region41: #{encoder_layer_forward.1} parent=1 // pred_fallthru
      _
    // Predicated region
    $region42: #{encoder_layer_forward.1} parent=1 // pred_check
      _
    $region43: #{encoder_layer_forward.1} parent=1 // pred_check_branch
      %84 = sbr.rel (0) target = $region45
    $region44: #{encoder_layer_forward.1} parent=1 // pred_region
      _
    $region45: #{encoder_layer_forward.1} parent=1 // pred_fallthru
      _
    // Predicated region
    $region46: #{encoder_layer_forward.1} parent=1 // pred_check
      _
    $region47: #{encoder_layer_forward.1} parent=1 // pred_check_branch
      %86 = sbr.rel (0) target = $region49
    $region48: #{encoder_layer_forward.1} parent=1 // pred_region
      %88 = dma.done [#allocation3], 6144
    $region49: #{encoder_layer_forward.1} parent=1 // pred_fallthru
      _
    // Predicated region
    $region50: #{encoder_layer_forward.1} parent=1 // pred_check
      _
    $region51: #{encoder_layer_forward.1} parent=1 // pred_check_branch
      %90 = sbr.rel (0) target = $region53
    $region52: #{encoder_layer_forward.1} parent=1 // pred_region
      %92 = dma.done [#allocation5], 2048
    $region53: #{encoder_layer_forward.1} parent=1 // pred_fallthru
      _
    // Predicated region
    $region54: #{encoder_layer_forward.1} parent=1 // pred_check
      _
    $region55: #{encoder_layer_forward.1} parent=1 // pred_check_branch
      %94 = sbr.rel (0) target = $region57
    $region56: #{encoder_layer_forward.1} parent=1 // pred_region
      %96 = dma.done [#allocation5], 2048
    $region57: #{encoder_layer_forward.1} parent=1 // pred_fallthru
      _
    // Predicated region
    $region58: #{encoder_layer_forward.1} parent=1 // pred_check
      _
    $region59: #{encoder_layer_forward.1} parent=1 // pred_check_branch
      %98 = sbr.rel (0) target = $region61
    $region60: #{encoder_layer_forward.1} parent=1 // pred_region
      %100 = dma.done [#allocation8], 2048
    $region61: #{encoder_layer_forward.1} parent=1 // pred_fallthru
      _
    %v102 = vld [vmem:[%s0] sm:$0xff]
    %v103 = vld [vmem:[%s0 + $0x8] sm:$0xff]
    %v104 = vld [vmem:[%s7] sm:$0x1]
    %v105 = vld [vmem:[%s8] sm:$0x1]
    %v106 = vadd.f32 %v102, %v103
    %v107 = vrot.slane %v106, 4
    %v108 = vadd.f32 %v106, %v107
    %v109 = vrot.slane %v108, 2
    %v110 = vadd.f32 %v108, %v109
    %v111 = vrot.slane %v110, 1
    %v112 = vadd.f32 %v110, %v111
    %v113 = vmul.f32 %v102, %v102
    %v114 = vmul.f32 %v103, %v103
    %v115 = vadd.f32 %v113, %v114
    %v116 = vrot.slane %v115, 4
    %v117 = vadd.f32 %v115, %v116
    %v118 = vrot.slane %v117, 2
    %v119 = vadd.f32 %v117, %v118
    %v120 = vrot.slane %v119, 1
    %v121 = vadd.f32 %v119, %v120
    %v122 = vmul.f32 %v112, 0.0625
    %v123 = vmul.f32 %v121, 0.0625
    %v124 = vmul.f32 %v122, %v122
    %v125 = vsub.f32 %v123, %v124
    %v126 = vmax.f32 %v125, 0.0
    %v127 = vadd.f32 %v126, 1e-05
    %v128 = vrsqrt.pop %v127
    %v129 = vmul.f32 %v128, %v127
    %v130 = vmul.f32 %v129, %v128
    %v131 = vmul.f32 0.5, %v130
    %v132 = vsub.f32 1.5, %v131
    %v133 = vmul.f32 %v128, %v132
    %vm134 = vweird.f32 %v127
    %vm135 = vweird.f32 %v128
    %vm136 = vmor %vm134, %vm135
    %v137 = vsel %vm136, %v128, %v133
    %v138 = vmul.f32 %v137, %v104
    %v139 = vmul.f32 %v122, %v138
    %v140 = vsub.f32 %v105, %v139
    %v141 = vperm.slane %v138, 0
    %v142 = vmul.f32 %v102, %v141
    %v143 = vmul.f32 %v103, %v141
    %v145 = vperm.slane %v140, 0
    %v147 = vadd.f32 %v142, %v145
    %v148 = vadd.f32 %v143, %v145
    %v149 = vpack.c.bf16 %v148, %v147
    %v150 = vld [vmem:[#allocation2] sm:$0xff]
    %v151 = vld [vmem:[#allocation2 + $0x8] sm:$0xff]
    %v152 = vld [vmem:[#allocation2 + $0x10] sm:$0xff]
    %v153 = vld [vmem:[#allocation2 + $0x18] sm:$0xff]
    %v154 = vld [vmem:[#allocation2 + $0x20] sm:$0xff]
    %v155 = vld [vmem:[#allocation2 + $0x28] sm:$0xff]
    %v156 = vld [vmem:[#allocation2 + $0x30] sm:$0xff]
    %v157 = vld [vmem:[#allocation2 + $0x38] sm:$0xff]
    %v158 = vld [vmem:[#allocation2 + $0x40] sm:$0xff]
    %v159 = vld [vmem:[#allocation2 + $0x48] sm:$0xff]
    %v160 = vld [vmem:[#allocation2 + $0x50] sm:$0xff]
    %v161 = vld [vmem:[#allocation2 + $0x58] sm:$0xff]
    %v162 = vld [vmem:[#allocation2 + $0x60] sm:$0xff]
    %v163 = vld [vmem:[#allocation2 + $0x68] sm:$0xff]
    %v164 = vld [vmem:[#allocation2 + $0x70] sm:$0xff]
    %v165 = vld [vmem:[#allocation2 + $0x78] sm:$0xff]
    %v166 = vld [vmem:[#allocation2 + $0x80] sm:$0xff]
    %v167 = vld [vmem:[#allocation2 + $0x88] sm:$0xff]
    %v168 = vld [vmem:[#allocation2 + $0x90] sm:$0xff]
    %v169 = vld [vmem:[#allocation2 + $0x98] sm:$0xff]
    %v170 = vld [vmem:[#allocation2 + $0xa0] sm:$0xff]
    %v171 = vld [vmem:[#allocation2 + $0xa8] sm:$0xff]
    %v172 = vld [vmem:[#allocation2 + $0xb0] sm:$0xff]
    %v173 = vld [vmem:[#allocation2 + $0xb8] sm:$0xff]
    %v174 = vld [vmem:[#allocation2 + $0xc0] sm:$0xff]
    %v175 = vld [vmem:[#allocation2 + $0xc8] sm:$0xff]
    %v176 = vld [vmem:[#allocation2 + $0xd0] sm:$0xff]
    %v177 = vld [vmem:[#allocation2 + $0xd8] sm:$0xff]
    %v178 = vld [vmem:[#allocation2 + $0xe0] sm:$0xff]
    %v179 = vld [vmem:[#allocation2 + $0xe8] sm:$0xff]
    %v180 = vld [vmem:[#allocation2 + $0xf0] sm:$0xff]
    %v181 = vld [vmem:[#allocation2 + $0xf8] sm:$0xff]
    %v182 = vld [vmem:[#allocation2 + $0x100] sm:$0xff]
    %v183 = vld [vmem:[#allocation2 + $0x108] sm:$0xff]
    %v184 = vld [vmem:[#allocation2 + $0x110] sm:$0xff]
    %v185 = vld [vmem:[#allocation2 + $0x118] sm:$0xff]
    %v186 = vld [vmem:[#allocation2 + $0x120] sm:$0xff]
    %v187 = vld [vmem:[#allocation2 + $0x128] sm:$0xff]
    %v188 = vld [vmem:[#allocation2 + $0x130] sm:$0xff]
    %v189 = vld [vmem:[#allocation2 + $0x138] sm:$0xff]
    %v190 = vld [vmem:[#allocation2 + $0x140] sm:$0xff]
    %v191 = vld [vmem:[#allocation2 + $0x148] sm:$0xff]
    %v192 = vld [vmem:[#allocation2 + $0x150] sm:$0xff]
    %v193 = vld [vmem:[#allocation2 + $0x158] sm:$0xff]
    %v194 = vld [vmem:[#allocation2 + $0x160] sm:$0xff]
    %v195 = vld [vmem:[#allocation2 + $0x168] sm:$0xff]
    %v196 = vld [vmem:[#allocation2 + $0x170] sm:$0xff]
    %v197 = vld [vmem:[#allocation2 + $0x178] sm:$0xff]
    %v198 = vpack.c.bf16 %v153, %v150
    %v199 = vpack.c.bf16 %v154, %v151
    %v200 = vpack.c.bf16 %v155, %v152
    %v201 = vpack.c.bf16 %v159, %v156
    %v202 = vpack.c.bf16 %v160, %v157
    %v203 = vpack.c.bf16 %v161, %v158
    %v204 = vpack.c.bf16 %v165, %v162
    %v205 = vpack.c.bf16 %v166, %v163
    %v206 = vpack.c.bf16 %v167, %v164
    %v207 = vpack.c.bf16 %v171, %v168
    %v208 = vpack.c.bf16 %v172, %v169
    %v209 = vpack.c.bf16 %v173, %v170
    %v210 = vpack.c.bf16 %v177, %v174
    %v211 = vpack.c.bf16 %v178, %v175
    %v212 = vpack.c.bf16 %v179, %v176
    %v213 = vpack.c.bf16 %v183, %v180
    %v214 = vpack.c.bf16 %v184, %v181
    %v215 = vpack.c.bf16 %v185, %v182
    %v216 = vpack.c.bf16 %v189, %v186
    %v217 = vpack.c.bf16 %v190, %v187
    %v218 = vpack.c.bf16 %v191, %v188
    %v219 = vpack.c.bf16 %v195, %v192
    %v220 = vpack.c.bf16 %v196, %v193
    %v221 = vpack.c.bf16 %v197, %v194
    %222 = vmatpush.bf16.msra.mxu0 %v219
    %223 = vmatpush.bf16.msra.mxu0 %v216
    %224 = vmatpush.bf16.msra.mxu0 %v213
    %225 = vmatpush.bf16.msra.mxu0 %v210
    %226 = vmatpush.bf16.msra.mxu0 %v207
    %227 = vmatpush.bf16.msra.mxu0 %v204
    %228 = vmatpush.bf16.msra.mxu0 %v201
    %229 = vmatpush.bf16.msra.mxu0 %v198
    %230 = vmatmul.bf16.gmra.mxu0 %v149
    %v231 = vpop.f32.mrf.mxu0
    %v232 = vadd.f32 0.0, %v231
    %v233 = vpop.f32.mrf.mxu0
    %v234 = vadd.f32 0.0, %v233
    %235 = vdwg.mxu0
    %236 = vmatpush.bf16.msra.mxu0 %v220
    %237 = vmatpush.bf16.msra.mxu0 %v217
    %238 = vmatpush.bf16.msra.mxu0 %v214
    %239 = vmatpush.bf16.msra.mxu0 %v211
    %240 = vmatpush.bf16.msra.mxu0 %v208
    %241 = vmatpush.bf16.msra.mxu0 %v205
    %242 = vmatpush.bf16.msra.mxu0 %v202
    %243 = vmatpush.bf16.msra.mxu0 %v199
    %244 = vmatmul.bf16.gmra.mxu0 %v149
    %v245 = vpop.f32.mrf.mxu0
    %v246 = vadd.f32 0.0, %v245
    %v247 = vpop.f32.mrf.mxu0
    %v248 = vadd.f32 0.0, %v247
    %249 = vdwg.mxu0
    %250 = vmatpush.bf16.msra.mxu0 %v221
    %251 = vmatpush.bf16.msra.mxu0 %v218
    %252 = vmatpush.bf16.msra.mxu0 %v215
    %253 = vmatpush.bf16.msra.mxu0 %v212
    %254 = vmatpush.bf16.msra.mxu0 %v209
    %255 = vmatpush.bf16.msra.mxu0 %v206
    %256 = vmatpush.bf16.msra.mxu0 %v203
    %257 = vmatpush.bf16.msra.mxu0 %v200
    %258 = vmatmul.bf16.gmra.mxu0 %v149
    %v259 = vpop.f32.mrf.mxu0
    %v260 = vadd.f32 0.0, %v259
    %v261 = vpop.f32.mrf.mxu0
    %v262 = vadd.f32 0.0, %v261
    %263 = vdwg.mxu0
    %v264 = vpack.c.bf16 %v232, %v232
    %v265 = vpack.c.bf16 %v234, %v234
    %v266 = vpack.c.bf16 %v246, %v246
    %v267 = vpack.c.bf16 %v248, %v248
    %268 = vmatpush.bf16.xpose.msra.mxu0 0
    %269 = vmatpush.bf16.xpose.msra.mxu0 0
    %270 = vmatpush.bf16.xpose.msra.mxu0 0
    %271 = vmatpush.bf16.xpose.msra.mxu0 0
    %272 = vmatpush.bf16.xpose.msra.mxu0 0
    %273 = vmatpush.bf16.xpose.msra.mxu0 0
    %274 = vmatpush.bf16.xpose.msra.mxu0 0
    %275 = vmatpush.bf16.xpose.msra.mxu0 %v266
    %276 = vmatmul.bf16.gmra.mxu0 %v264
    %v277 = vpop.f32.mrf.mxu0
    %v278 = vadd.f32 0.0, %v277
    %v279 = vpop.f32.mrf.mxu0
    %280 = vdwg.mxu0
    %281 = vmatpush.bf16.xpose.msra.mxu0 0
    %282 = vmatpush.bf16.xpose.msra.mxu0 0
    %283 = vmatpush.bf16.xpose.msra.mxu0 0
    %284 = vmatpush.bf16.xpose.msra.mxu0 0
    %285 = vmatpush.bf16.xpose.msra.mxu0 0
    %286 = vmatpush.bf16.xpose.msra.mxu0 0
    %287 = vmatpush.bf16.xpose.msra.mxu0 0
    %288 = vmatpush.bf16.xpose.msra.mxu0 %v267
    %289 = vmatmul.bf16.gmra.mxu0 %v265
    %v290 = vpop.f32.mrf.mxu0
    %v291 = vadd.f32 0.0, %v290
    %v292 = vpop.f32.mrf.mxu0
    %293 = vdwg.mxu0
    %vm294 = vcmask 64512
    %v295 = vsel %vm294, %v278, -inf
    %296 = vmax.xlane.f32.xlu0 %v295
    %v297 = vpop.xlane.xlu0 %296
    %v298 = vsel %vm294, %v291, -inf
    %299 = vmax.xlane.f32.xlu0 %v298
    %v300 = vpop.xlane.xlu0 %299
    %v301 = vsub.f32 %v278, %v297
    %v302 = vsub.f32 %v291, %v300
    %v303 = vmul.f32 %v301, 1.442695
    %v304 = vpow.pop %v303
    %v305 = vmul.f32 %v302, 1.442695
    %v306 = vpow.pop %v305
    %v307 = vsel %vm294, %v304, 0.0
    %308 = vadd.xlane.f32.xlu0 %v307
    %v309 = vpop.xlane.xlu0 %308
    %v310 = vsel %vm294, %v306, 0.0
    %311 = vadd.xlane.f32.xlu0 %v310
    %v312 = vpop.xlane.xlu0 %311
    %v313 = vrcp.pop %v309
    %v314 = vrcp.pop %v312
    %v315 = vmul.f32 %v304, %v313
    %v316 = vmul.f32 %v306, %v314
    %v317 = vpack.c.bf16 %v315, %v315
    %v318 = vpack.c.bf16 %v316, %v316
    %v319 = vpack.c.bf16 %v260, %v260
    %v320 = vpack.c.bf16 %v262, %v262
    %v322 = vsel %vm294, %v317, 0
    %vm324 = vcmask 1043456
    %v326 = vsel %vm324, %v319, 0
    %328 = vmatpush.bf16.msra.mxu0 0
    %329 = vmatpush.bf16.msra.mxu0 0
    %330 = vmatpush.bf16.msra.mxu0 0
    %331 = vmatpush.bf16.msra.mxu0 0
    %332 = vmatpush.bf16.msra.mxu0 0
    %333 = vmatpush.bf16.msra.mxu0 0
    %334 = vmatpush.bf16.msra.mxu0 0
    %335 = vmatpush.bf16.msra.mxu0 %v326
    %336 = vmatmul.bf16.gmra.mxu0 %v322
    %v337 = vpop.f32.mrf.mxu0
    %v338 = vadd.f32 0.0, %v337
    %v339 = vpop.f32.mrf.mxu0
    %340 = vdwg.mxu0
    %v342 = vsel %vm294, %v318, 0
    %v345 = vsel %vm324, %v320, 0
    %347 = vmatpush.bf16.msra.mxu0 0
    %348 = vmatpush.bf16.msra.mxu0 0
    %349 = vmatpush.bf16.msra.mxu0 0
    %350 = vmatpush.bf16.msra.mxu0 0
    %351 = vmatpush.bf16.msra.mxu0 0
    %352 = vmatpush.bf16.msra.mxu0 0
    %353 = vmatpush.bf16.msra.mxu0 0
    %354 = vmatpush.bf16.msra.mxu0 %v345
    %355 = vmatmul.bf16.gmra.mxu0 %v342
    %v356 = vpop.f32.mrf.mxu0
    %v357 = vadd.f32 0.0, %v356
    %v358 = vpop.f32.mrf.mxu0
    %359 = vdwg.mxu0
    %v360 = vpack.c.bf16 %v357, %v338
    %v361 = vld [vmem:[#allocation4] sm:$0xff]
    %v362 = vld [vmem:[#allocation4 + $0x8] sm:$0xff]
    %v363 = vld [vmem:[#allocation4 + $0x10] sm:$0xff]
    %v364 = vld [vmem:[#allocation4 + $0x18] sm:$0xff]
    %v365 = vld [vmem:[#allocation4 + $0x20] sm:$0xff]
    %v366 = vld [vmem:[#allocation4 + $0x28] sm:$0xff]
    %v367 = vld [vmem:[#allocation4 + $0x30] sm:$0xff]
    %v368 = vld [vmem:[#allocation4 + $0x38] sm:$0xff]
    %v369 = vld [vmem:[#allocation4 + $0x40] sm:$0xff]
    %v370 = vld [vmem:[#allocation4 + $0x48] sm:$0xff]
    %v371 = vld [vmem:[#allocation4 + $0x50] sm:$0xff]
    %v372 = vld [vmem:[#allocation4 + $0x58] sm:$0xff]
    %v373 = vld [vmem:[#allocation4 + $0x60] sm:$0xff]
    %v374 = vld [vmem:[#allocation4 + $0x68] sm:$0xff]
    %v375 = vld [vmem:[#allocation4 + $0x70] sm:$0xff]
    %v376 = vld [vmem:[#allocation4 + $0x78] sm:$0xff]
    %v377 = vpack.c.bf16 %v362, %v361
    %v378 = vpack.c.bf16 %v364, %v363
    %v379 = vpack.c.bf16 %v366, %v365
    %v380 = vpack.c.bf16 %v368, %v367
    %v381 = vpack.c.bf16 %v370, %v369
    %v382 = vpack.c.bf16 %v372, %v371
    %v383 = vpack.c.bf16 %v374, %v373
    %v384 = vpack.c.bf16 %v376, %v375
    %385 = vmatpush.bf16.msra.mxu0 %v384
    %386 = vmatpush.bf16.msra.mxu0 %v383
    %387 = vmatpush.bf16.msra.mxu0 %v382
    %388 = vmatpush.bf16.msra.mxu0 %v381
    %389 = vmatpush.bf16.msra.mxu0 %v380
    %390 = vmatpush.bf16.msra.mxu0 %v379
    %391 = vmatpush.bf16.msra.mxu0 %v378
    %392 = vmatpush.bf16.msra.mxu0 %v377
    %393 = vmatmul.bf16.gmra.mxu0 %v360
    %v394 = vpop.f32.mrf.mxu0
    %v395 = vadd.f32 0.0, %v394
    %v396 = vpop.f32.mrf.mxu0
    %v397 = vadd.f32 0.0, %v396
    %398 = vdwg.mxu0
    %v399 = vadd.f32 %v147, %v395
    %v400 = vadd.f32 %v148, %v397
    %v401 = vld [vmem:[%s9] sm:$0x1]
    %v402 = vld [vmem:[%s10] sm:$0x1]
    %v403 = vadd.f32 %v399, %v400
    %v404 = vrot.slane %v403, 4
    %v405 = vadd.f32 %v403, %v404
    %v406 = vrot.slane %v405, 2
    %v407 = vadd.f32 %v405, %v406
    %v408 = vrot.slane %v407, 1
    %v409 = vadd.f32 %v407, %v408
    %v410 = vmul.f32 %v399, %v399
    %v411 = vmul.f32 %v400, %v400
    %v412 = vadd.f32 %v410, %v411
    %v413 = vrot.slane %v412, 4
    %v414 = vadd.f32 %v412, %v413
    %v415 = vrot.slane %v414, 2
    %v416 = vadd.f32 %v414, %v415
    %v417 = vrot.slane %v416, 1
    %v418 = vadd.f32 %v416, %v417
    %v419 = vmul.f32 %v409, 0.0625
    %v420 = vmul.f32 %v418, 0.0625
    %v421 = vmul.f32 %v419, %v419
    %v422 = vsub.f32 %v420, %v421
    %v423 = vmax.f32 %v422, 0.0
    %v424 = vadd.f32 %v423, 1e-05
    %v425 = vrsqrt.pop %v424
    %v426 = vmul.f32 %v425, %v424
    %v427 = vmul.f32 %v426, %v425
    %v428 = vmul.f32 0.5, %v427
    %v429 = vsub.f32 1.5, %v428
    %v430 = vmul.f32 %v425, %v429
    %vm431 = vweird.f32 %v424
    %vm432 = vweird.f32 %v425
    %vm433 = vmor %vm431, %vm432
    %v434 = vsel %vm433, %v425, %v430
    %v435 = vmul.f32 %v434, %v401
    %v436 = vmul.f32 %v419, %v435
    %v437 = vsub.f32 %v402, %v436
    %v438 = vperm.slane %v435, 0
    %v439 = vmul.f32 %v399, %v438
    %v440 = vmul.f32 %v400, %v438
    %v442 = vperm.slane %v437, 0
    %v444 = vadd.f32 %v439, %v442
    %v445 = vadd.f32 %v440, %v442
    %v446 = vpack.c.bf16 %v445, %v444
    %v447 = vld [vmem:[#allocation6] sm:$0xff]
    %v448 = vld [vmem:[#allocation6 + $0x8] sm:$0xff]
    %v449 = vld [vmem:[#allocation6 + $0x10] sm:$0xff]
    %v450 = vld [vmem:[#allocation6 + $0x18] sm:$0xff]
    %v451 = vld [vmem:[#allocation6 + $0x20] sm:$0xff]
    %v452 = vld [vmem:[#allocation6 + $0x28] sm:$0xff]
    %v453 = vld [vmem:[#allocation6 + $0x30] sm:$0xff]
    %v454 = vld [vmem:[#allocation6 + $0x38] sm:$0xff]
    %v455 = vld [vmem:[#allocation6 + $0x40] sm:$0xff]
    %v456 = vld [vmem:[#allocation6 + $0x48] sm:$0xff]
    %v457 = vld [vmem:[#allocation6 + $0x50] sm:$0xff]
    %v458 = vld [vmem:[#allocation6 + $0x58] sm:$0xff]
    %v459 = vld [vmem:[#allocation6 + $0x60] sm:$0xff]
    %v460 = vld [vmem:[#allocation6 + $0x68] sm:$0xff]
    %v461 = vld [vmem:[#allocation6 + $0x70] sm:$0xff]
    %v462 = vld [vmem:[#allocation6 + $0x78] sm:$0xff]
    %v463 = vpack.c.bf16 %v448, %v447
    %v464 = vpack.c.bf16 %v450, %v449
    %v465 = vpack.c.bf16 %v452, %v451
    %v466 = vpack.c.bf16 %v454, %v453
    %v467 = vpack.c.bf16 %v456, %v455
    %v468 = vpack.c.bf16 %v458, %v457
    %v469 = vpack.c.bf16 %v460, %v459
    %v470 = vpack.c.bf16 %v462, %v461
    %v471 = vld [vmem:[%s4] sm:$0x1]
    %v473 = vperm.slane %v471, 0
    %475 = vmatpush.bf16.msra.mxu0 %v470
    %476 = vmatpush.bf16.msra.mxu0 %v469
    %477 = vmatpush.bf16.msra.mxu0 %v468
    %478 = vmatpush.bf16.msra.mxu0 %v467
    %479 = vmatpush.bf16.msra.mxu0 %v466
    %480 = vmatpush.bf16.msra.mxu0 %v465
    %481 = vmatpush.bf16.msra.mxu0 %v464
    %482 = vmatpush.bf16.msra.mxu0 %v463
    %483 = vmatmul.bf16.gmra.mxu0 %v446
    %v484 = vpop.f32.mrf.mxu0
    %v485 = vadd.f32 %v473, %v484
    %v486 = vpop.f32.mrf.mxu0
    %v487 = vadd.f32 %v473, %v486
    %488 = vdwg.mxu0
    %v489 = vmax.f32 %v485, 0.0
    %v490 = vmax.f32 %v487, 0.0
    %v491 = vpack.c.bf16 %v490, %v489
    %v492 = vld [vmem:[#allocation7] sm:$0xff]
    %v493 = vld [vmem:[#allocation7 + $0x8] sm:$0xff]
    %v494 = vld [vmem:[#allocation7 + $0x10] sm:$0xff]
    %v495 = vld [vmem:[#allocation7 + $0x18] sm:$0xff]
    %v496 = vld [vmem:[#allocation7 + $0x20] sm:$0xff]
    %v497 = vld [vmem:[#allocation7 + $0x28] sm:$0xff]
    %v498 = vld [vmem:[#allocation7 + $0x30] sm:$0xff]
    %v499 = vld [vmem:[#allocation7 + $0x38] sm:$0xff]
    %v500 = vld [vmem:[#allocation7 + $0x40] sm:$0xff]
    %v501 = vld [vmem:[#allocation7 + $0x48] sm:$0xff]
    %v502 = vld [vmem:[#allocation7 + $0x50] sm:$0xff]
    %v503 = vld [vmem:[#allocation7 + $0x58] sm:$0xff]
    %v504 = vld [vmem:[#allocation7 + $0x60] sm:$0xff]
    %v505 = vld [vmem:[#allocation7 + $0x68] sm:$0xff]
    %v506 = vld [vmem:[#allocation7 + $0x70] sm:$0xff]
    %v507 = vld [vmem:[#allocation7 + $0x78] sm:$0xff]
    %v508 = vpack.c.bf16 %v493, %v492
    %v509 = vpack.c.bf16 %v495, %v494
    %v510 = vpack.c.bf16 %v497, %v496
    %v511 = vpack.c.bf16 %v499, %v498
    %v512 = vpack.c.bf16 %v501, %v500
    %v513 = vpack.c.bf16 %v503, %v502
    %v514 = vpack.c.bf16 %v505, %v504
    %v515 = vpack.c.bf16 %v507, %v506
    %v516 = vld [vmem:[%s6] sm:$0x1]
    %v518 = vperm.slane %v516, 0
    %520 = vmatpush.bf16.msra.mxu0 %v515
    %521 = vmatpush.bf16.msra.mxu0 %v514
    %522 = vmatpush.bf16.msra.mxu0 %v513
    %523 = vmatpush.bf16.msra.mxu0 %v512
    %524 = vmatpush.bf16.msra.mxu0 %v511
    %525 = vmatpush.bf16.msra.mxu0 %v510
    %526 = vmatpush.bf16.msra.mxu0 %v509
    %527 = vmatpush.bf16.msra.mxu0 %v508
    %528 = vmatmul.bf16.gmra.mxu0 %v491
    %v529 = vpop.f32.mrf.mxu0
    %v530 = vadd.f32 %v518, %v529
    %v531 = vpop.f32.mrf.mxu0
    %v532 = vadd.f32 %v518, %v531
    %533 = vdwg.mxu0
    %v534 = vadd.f32 %v444, %v530
    %v535 = vadd.f32 %v445, %v532
    %536 = vst [vmem:[%s11] sm:$0xff] %v534
    %537 = vst [vmem:[%s11 + $0x8] sm:$0xff] %v535
    // Predicated region
    $region62: #{encoder_layer_forward.1} parent=1 // pred_check
      _
    $region63: #{encoder_layer_forward.1} parent=1 // pred_check_branch
      %539 = sbr.rel (0) target = $region65
    $region64: #{encoder_layer_forward.1} parent=1 // pred_region
      _
    $region65: #{encoder_layer_forward.1} parent=1 // pred_fallthru
      _
    // Predicated region
    $region66: #{encoder_layer_forward.1} parent=1 // pred_check
      _
    $region67: #{encoder_layer_forward.1} parent=1 // pred_check_branch
      %541 = sbr.rel (0) target = $region69
    $region68: #{encoder_layer_forward.1} parent=1 // pred_region
      _
    $region69: #{encoder_layer_forward.1} parent=1 // pred_fallthru
      _
    %542 = vsyncpa [#allocation3], 1
    %543 = vsyncpa [#allocation5], 1
    %544 = vsyncpa [#allocation8], 1

</llo_original>
